<compile_context>
chip_gen: v7x
topology: tpu7x:2x2x1
jax: 0.10.0
libtpu: 0.0.40
codegen_flags: <defaults>
</compile_context>

<pallas_src>
import jax
import jax.numpy as jnp
from jax.experimental import pallas as pl
from jax.experimental.pallas import tpu as pltpu


def _round_up(n, m):
    return (n + m - 1) // m * m


def _pad_to(a, shape):
    """Zero-pad `a` up to `shape`, skipping the op when already aligned."""
    pads = tuple((0, t - s) for s, t in zip(a.shape, shape))
    if any(p for _, p in pads):
        a = jnp.pad(a, pads)
    return a


def make_gcn_kernel(mxu_dtype):
    """Fused 2-layer GCN kernel for one packed group of graphs (one grid step).

    All matmul operands are fed to the MXU in `mxu_dtype` (bf16 by default,
    f32 for the exactness path); accumulation is always f32
    (preferred_element_type), and bias add / ReLU happen in f32 on the VPU
    (important on v5e, which has no bf16 VALU path).
    """
    def gcn_kernel(x_ref, adj_ref, w1_ref, b1_ref, w2_ref, b2_ref, out_ref):
        adj = adj_ref[...]                        # (M, M) block-diag, mxu_dtype

        # Layer 1: Linear (+bias in f32) then adj propagation.
        h = jnp.dot(x_ref[...], w1_ref[...],
                    preferred_element_type=jnp.float32) + b1_ref[...]
        h = jnp.dot(adj, h.astype(mxu_dtype),
                    preferred_element_type=jnp.float32)

        # ReLU in f32 (VPU).
        h = jnp.maximum(h, 0.0)

        # Layer 2: Linear (+bias in f32) then adj propagation.
        h2 = jnp.dot(h.astype(mxu_dtype), w2_ref[...],
                     preferred_element_type=jnp.float32) + b2_ref[...]
        out_ref[...] = jnp.dot(adj, h2.astype(mxu_dtype),
                               preferred_element_type=jnp.float32)
    return gcn_kernel


def my_gcn_pallas(x, adj, w1, b1, w2, b2, *, mxu_dtype=jnp.bfloat16):
    """Batched 2-layer GCN.

    x:   (B, N, Din) or (N, Din)
    adj: (B, N, N)   or (N, N)
    w1:  (Din, Dh)   b1: (1, Dh)   (nn.Linear weights pre-transposed)
    w2:  (Dh, Dout)  b2: (1, Dout)
    returns (B, N, Dout) (or (N, Dout) for unbatched input), float32.
    """
    squeeze_batch = (x.ndim == 2)
    if squeeze_batch:
        x = x[None]
        adj = adj[None]

    B, N, Din = x.shape
    Dh = w1.shape[1]
    Dout = w2.shape[1]

    # Node axis padded per-graph to the sublane multiple of the MXU dtype
    # (bf16 packs 16 rows per sublane-pair), feature axes to 128 lanes.
    sub = 16 if mxu_dtype == jnp.bfloat16 else 8
    Np = _round_up(N, sub)
    Dinp = _round_up(Din, 128)
    Dhp = _round_up(Dh, 128)
    Doutp = _round_up(Dout, 128)

    # Pack G graphs per grid step so the packed node dim M = G*Np is ~128
    # (dense MXU M, lane-dense adj).  Pad the batch with zero graphs so it
    # divides evenly; zero graphs produce rows that are sliced off below.
    G = max(1, 128 // Np)
    Bp = _round_up(B, G)
    Bg = Bp // G
    M = G * Np

    # ---- wrapper-side pad + cast (cast fused into the pad, skipped when
    # already aligned) ------------------------------------------------------
    xp = _pad_to(x.astype(mxu_dtype), (Bp, Np, Dinp)).reshape(Bg, M, Dinp)

    # Block-diagonal adjacency per group of G graphs:
    #   adj_blk[b, g*Np + i, h*Np + j] = adj[b*G + g, i, j] * (g == h)
    # Zero off-diagonal blocks and zero padded columns keep per-graph math
    # exact (padded rows of h pick up the bias but are killed by adj's zero
    # columns; padded / dummy-graph output rows are sliced off).
    adjp = _pad_to(adj.astype(mxu_dtype), (Bp, Np, Np)).reshape(Bg, G, Np, Np)
    eye_g = jnp.eye(G, dtype=mxu_dtype)
    adj_blk = (adjp[:, :, :, None, :] *
               eye_g[None, :, None, :, None]).reshape(Bg, M, M)

    w1p = _pad_to(w1.astype(mxu_dtype), (Dinp, Dhp))
    w2p = _pad_to(w2.astype(mxu_dtype), (Dhp, Doutp))
    b1p = _pad_to(b1.reshape(1, -1).astype(jnp.float32), (1, Dhp))
    b2p = _pad_to(b2.reshape(1, -1).astype(jnp.float32), (1, Doutp))

    elem = jnp.dtype(mxu_dtype).itemsize
    cost = pl.CostEstimate(
        flops=2 * Bg * (M * Dinp * Dhp + M * M * Dhp
                        + M * Dhp * Doutp + M * M * Doutp),
        transcendentals=0,
        bytes_accessed=(xp.size + adj_blk.size + w1p.size + w2p.size) * elem
                       + (b1p.size + b2p.size) * 4
                       + Bg * M * Doutp * 4,
    )

    out_padded = pl.pallas_call(
        make_gcn_kernel(mxu_dtype),
        out_shape=jax.ShapeDtypeStruct((Bg, M, Doutp), jnp.float32),
        grid=(Bg,),
        in_specs=[
            # Per-group blocks (group/batch dim squeezed out of kernel refs).
            pl.BlockSpec((None, M, Dinp), lambda b: (b, 0, 0)),   # x (packed)
            pl.BlockSpec((None, M, M), lambda b: (b, 0, 0)),      # adj (blkdiag)
            # Parameters shared across the grid axis.
            pl.BlockSpec((Dinp, Dhp), lambda b: (0, 0)),          # w1
            pl.BlockSpec((1, Dhp), lambda b: (0, 0)),             # b1
            pl.BlockSpec((Dhp, Doutp), lambda b: (0, 0)),         # w2
            pl.BlockSpec((1, Doutp), lambda b: (0, 0)),           # b2
        ],
        out_specs=pl.BlockSpec((None, M, Doutp), lambda b: (b, 0, 0)),
        compiler_params=pltpu.CompilerParams(
            dimension_semantics=("parallel",)),
        cost_estimate=cost,
    )(xp, adj_blk, w1p, b1p, w2p, b2p)

    # Unpack groups -> graphs, drop node/feature padding and dummy graphs.
    out = out_padded.reshape(Bp, Np, Doutp)[:B, :N, :Dout]
    if squeeze_batch:
        out = out[0]
    return out


def my_gcn_ref(x, adj, w1, b1, w2, b2):
    """Pure-JAX reference mirroring the PyTorch forward (single graph)."""
    h = x @ w1 + b1.reshape(1, -1)
    h = adj @ h
    h = jnp.maximum(h, 0.0)
    h2 = h @ w2 + b2.reshape(1, -1)
    return adj @ h2


if __name__ == "__main__":
    # Small shapes consistent with the module: a batch of B=32 graphs with
    # N=8 nodes each (as in the example tensor `x`), dim_in=4, dim_hidden=32,
    # dim_out=4.  B=32 keeps the packed grid length even (both v7x cores busy).
    B, N, DIN, DH, DOUT = 32, 8, 4, 32, 4

    key = jax.random.PRNGKey(0)
    kx, kadj, kw1, kb1, kw2, kb2 = jax.random.split(key, 6)

    x = jax.random.normal(kx, (B, N, DIN), dtype=jnp.float32)

    # Per-graph symmetric row-normalized adjacency with self-loops.
    a = (jax.random.uniform(kadj, (B, N, N)) > 0.5).astype(jnp.float32)
    a = jnp.maximum(a, jnp.swapaxes(a, -1, -2)) + jnp.eye(N, dtype=jnp.float32)
    adj = a / jnp.sum(a, axis=-1, keepdims=True)

    # Deterministic parameter init (PyTorch-Linear-style uniform bounds),
    # weights stored pre-transposed as (in, out).
    bound1 = 1.0 / jnp.sqrt(DIN)
    w1 = jax.random.uniform(kw1, (DIN, DH), minval=-bound1, maxval=bound1,
                            dtype=jnp.float32)
    b1 = jax.random.uniform(kb1, (1, DH), minval=-bound1, maxval=bound1,
                            dtype=jnp.float32)
    bound2 = 1.0 / jnp.sqrt(DH)
    w2 = jax.random.uniform(kw2, (DH, DOUT), minval=-bound2, maxval=bound2,
                            dtype=jnp.float32)
    b2 = jax.random.uniform(kb2, (1, DOUT), minval=-bound2, maxval=bound2,
                            dtype=jnp.float32)

    # Pure-JAX reference (per graph, exactly the PyTorch forward).
    ref = jnp.stack([my_gcn_ref(x[i], adj[i], w1, b1, w2, b2)
                     for i in range(B)])

    # f32 MXU path: exact semantics (block-diag packing adds only exact zeros).
    out_f32 = my_gcn_pallas(x, adj, w1, b1, w2, b2, mxu_dtype=jnp.float32)
    out_f32 = jax.block_until_ready(out_f32)
    assert out_f32.shape == (B, N, DOUT)
    assert jnp.allclose(out_f32, ref, atol=1e-5, rtol=1e-5), "f32 mismatch vs ref"

    # Default bf16-MXU path (f32 accumulation).  Inputs AND the f32
    # intermediates h/h2 are rounded to bf16 before each propagation, so the
    # error is slightly larger than pure input rounding; 5e-2 covers it.
    out_bf16 = my_gcn_pallas(x, adj, w1, b1, w2, b2)
    out_bf16 = jax.block_until_ready(out_bf16)
    assert out_bf16.shape == (B, N, DOUT)
    assert jnp.allclose(out_bf16, ref, atol=5e-2, rtol=5e-2), \
        "bf16 mismatch vs ref"

    print("KERNEL_OK")
</pallas_src>

<mosaic_0001>
module attributes {stable_mosaic.version = 11 : i64} {
  func.func @gcn_kernel(%arg0: i32, %arg1: memref<1x128x128xf32, #tpu.memory_space<vmem>>, %arg2: memref<1x128x128xf32, #tpu.memory_space<vmem>>, %arg3: memref<128x128xf32, #tpu.memory_space<vmem>>, %arg4: memref<1x128xf32, #tpu.memory_space<vmem>>, %arg5: memref<128x128xf32, #tpu.memory_space<vmem>>, %arg6: memref<1x128xf32, #tpu.memory_space<vmem>>, %arg7: memref<1x128x128xf32, #tpu.memory_space<vmem>>) attributes {dimension_semantics = [#tpu.dimension_semantics<parallel>], iteration_bounds = array<i64: 2>, scalar_prefetch = 0 : i64, scratch_operands = 0 : i64, tpu.core_type = #tpu.core_type<tc>, window_params = [{transform_indices = @transform_0, window_bounds = array<i64: 1, 128, 128>}, {transform_indices = @transform_1, window_bounds = array<i64: 1, 128, 128>}, {pipeline_mode = #tpu.pipeline_mode<synchronous>, transform_indices = @transform_2, window_bounds = array<i64: 128, 128>}, {pipeline_mode = #tpu.pipeline_mode<synchronous>, transform_indices = @transform_3, window_bounds = array<i64: 1, 128>}, {pipeline_mode = #tpu.pipeline_mode<synchronous>, transform_indices = @transform_4, window_bounds = array<i64: 128, 128>}, {pipeline_mode = #tpu.pipeline_mode<synchronous>, transform_indices = @transform_5, window_bounds = array<i64: 1, 128>}, {transform_indices = @transform_6, window_bounds = array<i64: 1, 128, 128>}]} {
    %c0 = arith.constant 0 : index
    %c0_0 = arith.constant 0 : index
    %c0_1 = arith.constant 0 : index
    %0 = vector.load %arg2[%c0, %c0_0, %c0_1] : memref<1x128x128xf32, #tpu.memory_space<vmem>>, vector<1x128x128xf32>
    %1 = vector.shape_cast %0 : vector<1x128x128xf32> to vector<128x128xf32>
    %c0_2 = arith.constant 0 : index
    %c0_3 = arith.constant 0 : index
    %c0_4 = arith.constant 0 : index
    %2 = vector.load %arg1[%c0_2, %c0_3, %c0_4] : memref<1x128x128xf32, #tpu.memory_space<vmem>>, vector<1x128x128xf32>
    %3 = vector.shape_cast %2 : vector<1x128x128xf32> to vector<128x128xf32>
    %c0_5 = arith.constant 0 : index
    %c0_6 = arith.constant 0 : index
    %4 = vector.load %arg3[%c0_5, %c0_6] : memref<128x128xf32, #tpu.memory_space<vmem>>, vector<128x128xf32>
    %cst = arith.constant dense<0.000000e+00> : vector<128x128xf32>
    %5 = tpu.matmul %3, %4, %cst {dimension_numbers = #tpu.dot_dimension_numbers<[1], [0], [0], [1], [0, 0, 1, 1], [], []>} : vector<128x128xf32>, vector<128x128xf32>, vector<128x128xf32> -> vector<128x128xf32>
    %c0_7 = arith.constant 0 : index
    %c0_8 = arith.constant 0 : index
    %6 = vector.load %arg4[%c0_7, %c0_8] : memref<1x128xf32, #tpu.memory_space<vmem>>, vector<1x128xf32>
    %7 = vector.broadcast %6 : vector<1x128xf32> to vector<128x128xf32>
    %8 = arith.addf %5, %7 : vector<128x128xf32>
    %cst_9 = arith.constant dense<0.000000e+00> : vector<128x128xf32>
    %9 = tpu.matmul %1, %8, %cst_9 {dimension_numbers = #tpu.dot_dimension_numbers<[1], [0], [0], [1], [0, 0, 1, 1], [], []>} : vector<128x128xf32>, vector<128x128xf32>, vector<128x128xf32> -> vector<128x128xf32>
    %cst_10 = arith.constant 0.000000e+00 : f32
    %10 = vector.broadcast %cst_10 : f32 to vector<128x128xf32>
    %11 = arith.maximumf %9, %10 : vector<128x128xf32>
    %c0_11 = arith.constant 0 : index
    %c0_12 = arith.constant 0 : index
    %12 = vector.load %arg5[%c0_11, %c0_12] : memref<128x128xf32, #tpu.memory_space<vmem>>, vector<128x128xf32>
    %cst_13 = arith.constant dense<0.000000e+00> : vector<128x128xf32>
    %13 = tpu.matmul %11, %12, %cst_13 {dimension_numbers = #tpu.dot_dimension_numbers<[1], [0], [0], [1], [0, 0, 1, 1], [], []>} : vector<128x128xf32>, vector<128x128xf32>, vector<128x128xf32> -> vector<128x128xf32>
    %c0_14 = arith.constant 0 : index
    %c0_15 = arith.constant 0 : index
    %14 = vector.load %arg6[%c0_14, %c0_15] : memref<1x128xf32, #tpu.memory_space<vmem>>, vector<1x128xf32>
    %15 = vector.broadcast %14 : vector<1x128xf32> to vector<128x128xf32>
    %16 = arith.addf %13, %15 : vector<128x128xf32>
    %cst_16 = arith.constant dense<0.000000e+00> : vector<128x128xf32>
    %17 = tpu.matmul %1, %16, %cst_16 {dimension_numbers = #tpu.dot_dimension_numbers<[1], [0], [0], [1], [0, 0, 1, 1], [], []>} : vector<128x128xf32>, vector<128x128xf32>, vector<128x128xf32> -> vector<128x128xf32>
    %c0_17 = arith.constant 0 : index
    %c0_18 = arith.constant 0 : index
    %c0_19 = arith.constant 0 : index
    %18 = vector.load %arg7[%c0_17, %c0_18, %c0_19] : memref<1x128x128xf32, #tpu.memory_space<vmem>>, vector<1x128x128xf32>
    %19 = vector.shape_cast %18 : vector<1x128x128xf32> to vector<128x128xf32>
    %20 = vector.shape_cast %17 : vector<128x128xf32> to vector<1x128x128xf32>
    tpu.vector_store %arg7[%c0_17, %c0_18, %c0_19], %20 {strides = array<i32>} : memref<1x128x128xf32, #tpu.memory_space<vmem>>, vector<1x128x128xf32>,
    return
  }
  func.func @transform_0(%arg0: i32) -> (i32, i32, i32) {
    %c0_i32 = arith.constant 0 : i32
    %c0_i32_0 = arith.constant 0 : i32
    %c0_i32_1 = arith.constant 0 : i32
    return %arg0, %c0_i32, %c0_i32_0 : i32, i32, i32
  }
  func.func @transform_1(%arg0: i32) -> (i32, i32, i32) {
    %c0_i32 = arith.constant 0 : i32
    %c0_i32_0 = arith.constant 0 : i32
    %c0_i32_1 = arith.constant 0 : i32
    return %arg0, %c0_i32, %c0_i32_0 : i32, i32, i32
  }
  func.func @transform_2(%arg0: i32) -> (i32, i32) {
    %c0_i32 = arith.constant 0 : i32
    %c0_i32_0 = arith.constant 0 : i32
    %c0_i32_1 = arith.constant 0 : i32
    return %c0_i32, %c0_i32_0 : i32, i32
  }
  func.func @transform_3(%arg0: i32) -> (i32, i32) {
    %c0_i32 = arith.constant 0 : i32
    %c0_i32_0 = arith.constant 0 : i32
    %c0_i32_1 = arith.constant 0 : i32
    return %c0_i32, %c0_i32_0 : i32, i32
  }
  func.func @transform_4(%arg0: i32) -> (i32, i32) {
    %c0_i32 = arith.constant 0 : i32
    %c0_i32_0 = arith.constant 0 : i32
    %c0_i32_1 = arith.constant 0 : i32
    return %c0_i32, %c0_i32_0 : i32, i32
  }
  func.func @transform_5(%arg0: i32) -> (i32, i32) {
    %c0_i32 = arith.constant 0 : i32
    %c0_i32_0 = arith.constant 0 : i32
    %c0_i32_1 = arith.constant 0 : i32
    return %c0_i32, %c0_i32_0 : i32, i32
  }
  func.func @transform_6(%arg0: i32) -> (i32, i32, i32) {
    %c0_i32 = arith.constant 0 : i32
    %c0_i32_0 = arith.constant 0 : i32
    %c0_i32_1 = arith.constant 0 : i32
    return %arg0, %c0_i32, %c0_i32_0 : i32, i32, i32
  }
}

</mosaic_0001>

<llo_original>
// kernel: tpu_custom_call.1
$region0: #{tpu_custom_call.1}
  #allocation0 [shape = 'u32[]', space=smem, size = 0x4, offset = 0x4, fixed_abs, tag = 'smem constant byte address 0x4 - core index']
  #allocation1 [shape = 'u32[144,128]{1,0:T(1,128)}', space=vmem, size = 0x12000, scoped, tag = 'internal scratch']
  %s0 = inlined_call_operand.hbm [shape: f32[2,128,128], index: 0, kind: input, shape index: {}]
  %s1 = inlined_call_operand.hbm [shape: f32[2,128,128], index: 1, kind: input, shape index: {}]
  %s2 = inlined_call_operand.hbm [shape: f32[128,128], index: 2, kind: input, shape index: {}]
  %s3 = inlined_call_operand.vmem [shape: f32[1,128], index: 3, kind: input, shape index: {}]
  %s4 = inlined_call_operand.hbm [shape: f32[128,128], index: 4, kind: input, shape index: {}]
  %s5 = inlined_call_operand.vmem [shape: f32[1,128], index: 5, kind: input, shape index: {}]
  %s6 = inlined_call_operand.hbm [shape: f32[2,128,128], index: 6, kind: output, shape index: {}]
  %s7 = sld [smem:[#allocation0]]
  $region73: #{tpu_custom_call.1} parent=0
    _
  %s9 = ssub.s32 1, %s7
  %s10 = scalar_select 0, %s9, %s7
  $region1: #{tpu_custom_call.1} parent=0
    #allocation2 [shape = 'u8[131072]{0}', space=vmem, size = 0x20000, scoped, tag = 'input window, operand 0']
    #allocation3 [shape = 's32[2]{0}', space=sflag, size = 0x8, scoped, tag = 'scoped memory for tpu_custom_call.1']
    #allocation4 [shape = 's32[2]{0}', space=sflag, size = 0x8, scoped, tag = 'scoped memory for tpu_custom_call.1']
    #allocation5 [shape = 'u8[131072]{0}', space=vmem, size = 0x20000, scoped, tag = 'input window, operand 1']
    #allocation6 [shape = 's32[2]{0}', space=sflag, size = 0x8, scoped, tag = 'scoped memory for tpu_custom_call.1']
    #allocation7 [shape = 'u8[65536]{0}', space=vmem, size = 0x10000, scoped, tag = 'input window, operand 2, single buffered']
    #allocation8 [shape = 'u8[65536]{0}', space=vmem, size = 0x10000, scoped, tag = 'input window, operand 4, single buffered']
    #allocation9 [shape = 's32[1]{0}', space=sflag, size = 0x4, scoped, tag = 'scoped memory for tpu_custom_call.1']
    #allocation10 [shape = 'u8[131072]{0}', space=vmem, size = 0x20000, scoped, tag = 'output window, operand 0']
    %11 = vsyncpa [#allocation3], 0
    %s12 = scalar_lea.sflag [#allocation3], 1
    %13 = vsyncpa %s12, 0
    %14 = vsyncpa [#allocation6], 0
    %s15 = scalar_lea.sflag [#allocation6], 1
    %16 = vsyncpa %s15, 0
    %17 = vsyncpa [#allocation9], 0
    %18 = vsyncpa [#allocation4], 0
    %s19 = scalar_lea.sflag [#allocation4], 1
    %20 = vsyncpa %s19, 0
    loop: start=0, step=1, limit=4
    $region2: #{tpu_custom_call.1} parent=1 // loop_pre_header
      _
    $region3: #{tpu_custom_call.1} parent=1 // loop_header
      %s22 = sphi 0, %s26
      %p23 = scmp.ge.s32.totalorder %s22, 4
      %s32 = sphi 0, %s34
      %s35 = sphi 0, %s32
      %s36 = sphi 0, %s35
      %s52 = sphi 0, %s36
      %s58 = sphi 0, %s60
      %s61 = sphi 0, %s58
      %s62 = sphi 0, %s61
      %s78 = sphi 0, %s62
      %s82 = sphi 0, %s82
      %s84 = sphi 0, %s82
      %s85 = sphi 0, %s84
      %s99 = sphi 0, %s85
      %s103 = sphi 0, %s103
      %s105 = sphi 0, %s103
      %s106 = sphi 0, %s105
      %s120 = sphi 0, %s106
      %s124 = sphi 0, %s124
      %s126 = sphi 0, %s124
      %s127 = sphi 0, %s126
      %s141 = sphi 0, %s127
      %s145 = sphi 0, %s145
      %s147 = sphi 0, %s145
      %s148 = sphi 0, %s147
      %s162 = sphi 0, %s148
      %s168 = sphi 0, %s170
      %s171 = sphi 0, %s168
      %s172 = sphi 0, %s171
      %s188 = sphi 0, %s172
    $region4: #{tpu_custom_call.1} parent=1 // loop_header_branch
      %25 = sbr.rel (%p23) target = $region8
    $region5: #{tpu_custom_call.1} parent=1 // loop_body
      %s27 = ssub.s32 %s22, 1
      %s28 = ssub.s32 %s22, 2
      %s29 = sadd.s32 %s22, 1
      %s30 = ssub.s32 %s22, %s29
      %p31 = scmp.eq.s32.totalorder %s30, 0
      %s33 = sadd.s32 %s32, 1
      %s34 = scalar_select %p31, %s32, %s33
      %p37 = pneg %p31
      %p38 = scmp.eq.s32.totalorder %s22, 1
      %p39 = por %p37, %p38
      %p40 = scmp.ne.s32.totalorder %s32, %s35
      %p41 = scmp.eq.s32.totalorder %s22, 0
      %p42 = por %p40, %p41
      %p43 = scmp.ne.s32.totalorder %s32, %s35
      %p44 = scmp.eq.s32.totalorder %s27, 1
      %p45 = por %p43, %p44
      %p46 = scmp.ne.s32.totalorder %s35, %s36
      %p47 = scmp.eq.s32.totalorder %s27, 0
      %p48 = por %p46, %p47
      %p49 = scmp.ne.s32.totalorder %s35, %s36
      %p50 = scmp.eq.s32.totalorder %s28, 1
      %p51 = por %p49, %p50
      %p53 = scmp.ne.s32.totalorder %s36, %s52
      %p54 = scmp.eq.s32.totalorder %s28, 0
      %p55 = por %p53, %p54
      %s56 = ssub.s32 %s22, %s29
      %p57 = scmp.eq.s32.totalorder %s56, 0
      %s59 = sadd.s32 %s58, 1
      %s60 = scalar_select %p57, %s58, %s59
      %p63 = pneg %p57
      %p64 = scmp.eq.s32.totalorder %s22, 1
      %p65 = por %p63, %p64
      %p66 = scmp.ne.s32.totalorder %s58, %s61
      %p67 = scmp.eq.s32.totalorder %s22, 0
      %p68 = por %p66, %p67
      %p69 = scmp.ne.s32.totalorder %s58, %s61
      %p70 = scmp.eq.s32.totalorder %s27, 1
      %p71 = por %p69, %p70
      %p72 = scmp.ne.s32.totalorder %s61, %s62
      %p73 = scmp.eq.s32.totalorder %s27, 0
      %p74 = por %p72, %p73
      %p75 = scmp.ne.s32.totalorder %s61, %s62
      %p76 = scmp.eq.s32.totalorder %s28, 1
      %p77 = por %p75, %p76
      %p79 = scmp.ne.s32.totalorder %s62, %s78
      %p80 = scmp.eq.s32.totalorder %s28, 0
      %p81 = por %p79, %p80
      %s83 = sadd.s32 %s82, 1
      %p86 = scmp.eq.s32.totalorder %s22, 1
      %p87 = scmp.ne.s32.totalorder %s82, %s84
      %p88 = scmp.eq.s32.totalorder %s22, 0
      %p89 = por %p87, %p88
      %p90 = scmp.ne.s32.totalorder %s82, %s84
      %p91 = scmp.eq.s32.totalorder %s27, 1
      %p92 = por %p90, %p91
      %p93 = scmp.ne.s32.totalorder %s84, %s85
      %p94 = scmp.eq.s32.totalorder %s27, 0
      %p95 = por %p93, %p94
      %p96 = scmp.ne.s32.totalorder %s84, %s85
      %p97 = scmp.eq.s32.totalorder %s28, 1
      %p98 = por %p96, %p97
      %p100 = scmp.ne.s32.totalorder %s85, %s99
      %p101 = scmp.eq.s32.totalorder %s28, 0
      %p102 = por %p100, %p101
      %s104 = sadd.s32 %s103, 1
      %p107 = scmp.eq.s32.totalorder %s22, 1
      %p108 = scmp.ne.s32.totalorder %s103, %s105
      %p109 = scmp.eq.s32.totalorder %s22, 0
      %p110 = por %p108, %p109
      %p111 = scmp.ne.s32.totalorder %s103, %s105
      %p112 = scmp.eq.s32.totalorder %s27, 1
      %p113 = por %p111, %p112
      %p114 = scmp.ne.s32.totalorder %s105, %s106
      %p115 = scmp.eq.s32.totalorder %s27, 0
      %p116 = por %p114, %p115
      %p117 = scmp.ne.s32.totalorder %s105, %s106
      %p118 = scmp.eq.s32.totalorder %s28, 1
      %p119 = por %p117, %p118
      %p121 = scmp.ne.s32.totalorder %s106, %s120
      %p122 = scmp.eq.s32.totalorder %s28, 0
      %p123 = por %p121, %p122
      %s125 = sadd.s32 %s124, 1
      %p128 = scmp.eq.s32.totalorder %s22, 1
      %p129 = scmp.ne.s32.totalorder %s124, %s126
      %p130 = scmp.eq.s32.totalorder %s22, 0
      %p131 = por %p129, %p130
      %p132 = scmp.ne.s32.totalorder %s124, %s126
      %p133 = scmp.eq.s32.totalorder %s27, 1
      %p134 = por %p132, %p133
      %p135 = scmp.ne.s32.totalorder %s126, %s127
      %p136 = scmp.eq.s32.totalorder %s27, 0
      %p137 = por %p135, %p136
      %p138 = scmp.ne.s32.totalorder %s126, %s127
      %p139 = scmp.eq.s32.totalorder %s28, 1
      %p140 = por %p138, %p139
      %p142 = scmp.ne.s32.totalorder %s127, %s141
      %p143 = scmp.eq.s32.totalorder %s28, 0
      %p144 = por %p142, %p143
      %s146 = sadd.s32 %s145, 1
      %p149 = scmp.eq.s32.totalorder %s22, 1
      %p150 = scmp.ne.s32.totalorder %s145, %s147
      %p151 = scmp.eq.s32.totalorder %s22, 0
      %p152 = por %p150, %p151
      %p153 = scmp.ne.s32.totalorder %s145, %s147
      %p154 = scmp.eq.s32.totalorder %s27, 1
      %p155 = por %p153, %p154
      %p156 = scmp.ne.s32.totalorder %s147, %s148
      %p157 = scmp.eq.s32.totalorder %s27, 0
      %p158 = por %p156, %p157
      %p159 = scmp.ne.s32.totalorder %s147, %s148
      %p160 = scmp.eq.s32.totalorder %s28, 1
      %p161 = por %p159, %p160
      %p163 = scmp.ne.s32.totalorder %s148, %s162
      %p164 = scmp.eq.s32.totalorder %s28, 0
      %p165 = por %p163, %p164
      %s166 = ssub.s32 %s22, %s29
      %p167 = scmp.eq.s32.totalorder %s166, 0
      %s169 = sadd.s32 %s168, 1
      %s170 = scalar_select %p167, %s168, %s169
      %p173 = pneg %p167
      %p174 = scmp.eq.s32.totalorder %s22, 1
      %p175 = por %p173, %p174
      %p176 = scmp.ne.s32.totalorder %s168, %s171
      %p177 = scmp.eq.s32.totalorder %s22, 0
      %p178 = por %p176, %p177
      %p179 = scmp.ne.s32.totalorder %s168, %s171
      %p180 = scmp.eq.s32.totalorder %s27, 1
      %p181 = por %p179, %p180
      %p182 = scmp.ne.s32.totalorder %s171, %s172
      %p183 = scmp.eq.s32.totalorder %s27, 0
      %p184 = por %p182, %p183
      %p185 = scmp.ne.s32.totalorder %s171, %s172
      %p186 = scmp.eq.s32.totalorder %s28, 1
      %p187 = por %p185, %p186
      %p189 = scmp.ne.s32.totalorder %s172, %s188
      %p190 = scmp.eq.s32.totalorder %s28, 0
      %p191 = por %p189, %p190
      %p192 = scmp.le.s32.totalorder 1, %s22
      %p193 = scmp.lt.s32.totalorder %s22, 3
      %p194 = pnand %p192, %p193
      %p195 = pneg %p194
      // Predicated region
      $region9: #{tpu_custom_call.1} parent=5 // pred_check
        _
      $region10: #{tpu_custom_call.1} parent=5 // pred_check_branch
        %197 = sbr.rel (%p194) target = $region12
      $region11: #{tpu_custom_call.1} parent=5 // pred_region
        %s198 = ssub.s32 %s22, 1
        // Predicated region
        $region13: #{tpu_custom_call.1} parent=11 // pred_check
          %p199 = pneg %p95
        $region14: #{tpu_custom_call.1} parent=11 // pred_check_branch
          %201 = sbr.rel (%p199) target = $region16
        $region15: #{tpu_custom_call.1} parent=11 // pred_region
          %s203 = ssub.s32 2048, 2048
          %204 = vsyncadd [#allocation6], %s203
          %s205 = sshll.u32 [#allocation7], 4
          %s206 = int_to_ptr.vmem [resolvable:$true] %s205
          %211 = dma.hbm_to_vmem [thread:$0]  %s2, 2048, %s206, [#allocation6], 128, 128, 8
        $region16: #{tpu_custom_call.1} parent=11 // pred_fallthru
          _
        // Predicated region
        $region17: #{tpu_custom_call.1} parent=11 // pred_check
          %p212 = pneg %p116
        $region18: #{tpu_custom_call.1} parent=11 // pred_check_branch
          %214 = sbr.rel (%p212) target = $region20
        $region19: #{tpu_custom_call.1} parent=11 // pred_region
          _
        $region20: #{tpu_custom_call.1} parent=11 // pred_fallthru
          _
        // Predicated region
        $region21: #{tpu_custom_call.1} parent=11 // pred_check
          %p215 = pneg %p137
        $region22: #{tpu_custom_call.1} parent=11 // pred_check_branch
          %217 = sbr.rel (%p215) target = $region24
        $region23: #{tpu_custom_call.1} parent=11 // pred_region
          %s219 = ssub.s32 2048, 2048
          %220 = vsyncadd [#allocation9], %s219
          %s221 = sshll.u32 [#allocation8], 4
          %s222 = int_to_ptr.vmem [resolvable:$true] %s221
          %227 = dma.hbm_to_vmem [thread:$0]  %s4, 2048, %s222, [#allocation9], 128, 128, 8
        $region24: #{tpu_custom_call.1} parent=11 // pred_fallthru
          _
        // Predicated region
        $region25: #{tpu_custom_call.1} parent=11 // pred_check
          %p228 = pneg %p158
        $region26: #{tpu_custom_call.1} parent=11 // pred_check_branch
          %230 = sbr.rel (%p228) target = $region28
        $region27: #{tpu_custom_call.1} parent=11 // pred_region
          _
        $region28: #{tpu_custom_call.1} parent=11 // pred_fallthru
          _
      $region12: #{tpu_custom_call.1} parent=5 // pred_fallthru
        _
      %p231 = scmp.lt.s32.totalorder %s22, 2
      // Predicated region
      $region29: #{tpu_custom_call.1} parent=5 // pred_check
        %p232 = pneg %p231
      $region30: #{tpu_custom_call.1} parent=5 // pred_check_branch
        %234 = sbr.rel (%p232) target = $region32
      $region31: #{tpu_custom_call.1} parent=5 // pred_region
        // Predicated region
        $region33: #{tpu_custom_call.1} parent=31 // pred_check
          %p235 = pneg %p42
        $region34: #{tpu_custom_call.1} parent=31 // pred_check_branch
          %237 = sbr.rel (%p235) target = $region36
        $region35: #{tpu_custom_call.1} parent=31 // pred_region
          %s238 = sand.u32 %s32, 1
          %s239 = scalar_lea.sflag [#allocation3], %s238
          %s240 = sand.u32 %s32, 1
          %s241 = smul.addr %s240, 128
          %s242 = scalar_lea.vmem [#allocation2], %s241
          %s244 = ssub.s32 2048, 2048
          %245 = vsyncadd %s239, %s244
          %s246 = smul.addr %s22, 16
          %s247 = smul.addr %s246, 128
          %s248 = scalar_lea.hbm %s0, %s247
          %s249 = sshll.u32 %s242, 4
          %s250 = int_to_ptr.vmem [resolvable:$true] %s249
          %255 = dma.hbm_to_vmem [thread:$0]  %s248, 2048, %s250, %s239, 128, 128, 8
        $region36: #{tpu_custom_call.1} parent=31 // pred_fallthru
          _
        // Predicated region
        $region37: #{tpu_custom_call.1} parent=31 // pred_check
          %p256 = pneg %p68
        $region38: #{tpu_custom_call.1} parent=31 // pred_check_branch
          %258 = sbr.rel (%p256) target = $region40
        $region39: #{tpu_custom_call.1} parent=31 // pred_region
          %s259 = sand.u32 %s22, 1
          %s260 = scalar_lea.sflag [#allocation6], %s259
          %s261 = sand.u32 %s58, 1
          %s262 = smul.addr %s261, 128
          %s263 = scalar_lea.vmem [#allocation5], %s262
          %s265 = ssub.s32 2048, 2048
          %266 = vsyncadd %s260, %s265
          %s267 = smul.addr %s22, 16
          %s268 = smul.addr %s267, 128
          %s269 = scalar_lea.hbm %s1, %s268
          %s270 = sshll.u32 %s263, 4
          %s271 = int_to_ptr.vmem [resolvable:$true] %s270
          %276 = dma.hbm_to_vmem [thread:$0]  %s269, 2048, %s271, %s260, 128, 128, 8
        $region40: #{tpu_custom_call.1} parent=31 // pred_fallthru
          _
      $region32: #{tpu_custom_call.1} parent=5 // pred_fallthru
        _
      %p277 = scmp.le.s32.totalorder 1, %s22
      %p278 = scmp.lt.s32.totalorder %s22, 3
      %p279 = pnand %p277, %p278
      %p280 = pneg %p279
      // Predicated region
      $region41: #{tpu_custom_call.1} parent=5 // pred_check
        _
      $region42: #{tpu_custom_call.1} parent=5 // pred_check_branch
        %282 = sbr.rel (%p279) target = $region44
      $region43: #{tpu_custom_call.1} parent=5 // pred_region
        %s283 = ssub.s32 %s22, 1
        %s284 = sand.u32 %s35, 1
        %s285 = scalar_lea.sflag [#allocation3], %s284
        %s286 = sand.u32 %s35, 1
        %s287 = smul.addr %s286, 128
        %s288 = scalar_lea.vmem [#allocation2], %s287
        // Predicated region
        $region45: #{tpu_custom_call.1} parent=43 // pred_check
          %p289 = pneg %p48
        $region46: #{tpu_custom_call.1} parent=43 // pred_check_branch
          %291 = sbr.rel (%p289) target = $region48
        $region47: #{tpu_custom_call.1} parent=43 // pred_region
          %292 = dma.done %s285, 2048
        $region48: #{tpu_custom_call.1} parent=43 // pred_fallthru
          _
        %s293 = sand.u32 %s27, 1
        %s294 = scalar_lea.sflag [#allocation6], %s293
        %s295 = sand.u32 %s61, 1
        %s296 = smul.addr %s295, 128
        %s297 = scalar_lea.vmem [#allocation5], %s296
        // Predicated region
        $region49: #{tpu_custom_call.1} parent=43 // pred_check
          %p298 = pneg %p74
        $region50: #{tpu_custom_call.1} parent=43 // pred_check_branch
          %300 = sbr.rel (%p298) target = $region52
        $region51: #{tpu_custom_call.1} parent=43 // pred_region
          %301 = dma.done %s294, 2048
        $region52: #{tpu_custom_call.1} parent=43 // pred_fallthru
          _
        // Predicated region
        $region53: #{tpu_custom_call.1} parent=43 // pred_check
          %p302 = pneg %p95
        $region54: #{tpu_custom_call.1} parent=43 // pred_check_branch
          %304 = sbr.rel (%p302) target = $region56
        $region55: #{tpu_custom_call.1} parent=43 // pred_region
          %305 = dma.done [#allocation6], 2048
        $region56: #{tpu_custom_call.1} parent=43 // pred_fallthru
          _
        // Predicated region
        $region57: #{tpu_custom_call.1} parent=43 // pred_check
          %p306 = pneg %p137
        $region58: #{tpu_custom_call.1} parent=43 // pred_check_branch
          %308 = sbr.rel (%p306) target = $region60
        $region59: #{tpu_custom_call.1} parent=43 // pred_region
          %309 = dma.done [#allocation9], 2048
        $region60: #{tpu_custom_call.1} parent=43 // pred_fallthru
          _
        %s310 = sand.u32 %s35, 1
        %s311 = scalar_lea.sflag [#allocation3], %s310
        %s312 = sand.u32 %s35, 1
        %s313 = smul.addr %s312, 128
        %s314 = scalar_lea.vmem [#allocation2], %s313
        %p315 = pneg %p48
        %p316 = pneg %p45
        %s317 = sand.u32 %s27, 1
        %s318 = scalar_lea.sflag [#allocation6], %s317
        %s319 = sand.u32 %s61, 1
        %s320 = smul.addr %s319, 128
        %s321 = scalar_lea.vmem [#allocation5], %s320
        %p322 = pneg %p74
        %p323 = pneg %p71
        %p324 = pneg %p95
        %p325 = pneg %p92
        %p326 = pneg %p116
        %p327 = pneg %p113
        %p328 = pneg %p137
        %p329 = pneg %p134
        %p330 = pneg %p158
        %p331 = pneg %p155
        %p332 = pneg %p184
        %p333 = pneg %p181
        %s334 = sand.u32 %s171, 1
        %s335 = scalar_lea.sflag [#allocation4], %s334
        %s336 = sand.u32 %s171, 1
        %s337 = smul.addr %s336, 128
        %s338 = scalar_lea.vmem [#allocation10], %s337
        %v339 = vld [vmem:[%s297] sm:$0xff]
        %v340 = vld [vmem:[%s297 + $0x8] sm:$0xff]
        %v341 = vld [vmem:[%s297 + $0x10] sm:$0xff]
        %v342 = vld [vmem:[%s297 + $0x18] sm:$0xff]
        %v343 = vld [vmem:[%s297 + $0x20] sm:$0xff]
        %v344 = vld [vmem:[%s297 + $0x28] sm:$0xff]
        %v345 = vld [vmem:[%s297 + $0x30] sm:$0xff]
        %v346 = vld [vmem:[%s297 + $0x38] sm:$0xff]
        %v347 = vld [vmem:[%s297 + $0x40] sm:$0xff]
        %v348 = vld [vmem:[%s297 + $0x48] sm:$0xff]
        %v349 = vld [vmem:[%s297 + $0x50] sm:$0xff]
        %v350 = vld [vmem:[%s297 + $0x58] sm:$0xff]
        %v351 = vld [vmem:[%s297 + $0x60] sm:$0xff]
        %v352 = vld [vmem:[%s297 + $0x68] sm:$0xff]
        %v353 = vld [vmem:[%s297 + $0x70] sm:$0xff]
        %v354 = vld [vmem:[%s297 + $0x78] sm:$0xff]
        %v355 = vld [vmem:[%s288] sm:$0xff]
        %v356 = vld [vmem:[%s288 + $0x8] sm:$0xff]
        %v357 = vld [vmem:[%s288 + $0x10] sm:$0xff]
        %v358 = vld [vmem:[%s288 + $0x18] sm:$0xff]
        %v359 = vld [vmem:[%s288 + $0x20] sm:$0xff]
        %v360 = vld [vmem:[%s288 + $0x28] sm:$0xff]
        %v361 = vld [vmem:[%s288 + $0x30] sm:$0xff]
        %v362 = vld [vmem:[%s288 + $0x38] sm:$0xff]
        %v363 = vld [vmem:[%s288 + $0x40] sm:$0xff]
        %v364 = vld [vmem:[%s288 + $0x48] sm:$0xff]
        %v365 = vld [vmem:[%s288 + $0x50] sm:$0xff]
        %v366 = vld [vmem:[%s288 + $0x58] sm:$0xff]
        %v367 = vld [vmem:[%s288 + $0x60] sm:$0xff]
        %v368 = vld [vmem:[%s288 + $0x68] sm:$0xff]
        %v369 = vld [vmem:[%s288 + $0x70] sm:$0xff]
        %v370 = vld [vmem:[%s288 + $0x78] sm:$0xff]
        %v371 = vld [vmem:[#allocation7] sm:$0xff]
        %v372 = vld [vmem:[#allocation7 + $0x8] sm:$0xff]
        %v373 = vld [vmem:[#allocation7 + $0x10] sm:$0xff]
        %v374 = vld [vmem:[#allocation7 + $0x18] sm:$0xff]
        %v375 = vld [vmem:[#allocation7 + $0x20] sm:$0xff]
        %v376 = vld [vmem:[#allocation7 + $0x28] sm:$0xff]
        %v377 = vld [vmem:[#allocation7 + $0x30] sm:$0xff]
        %v378 = vld [vmem:[#allocation7 + $0x38] sm:$0xff]
        %v379 = vld [vmem:[#allocation7 + $0x40] sm:$0xff]
        %v380 = vld [vmem:[#allocation7 + $0x48] sm:$0xff]
        %v381 = vld [vmem:[#allocation7 + $0x50] sm:$0xff]
        %v382 = vld [vmem:[#allocation7 + $0x58] sm:$0xff]
        %v383 = vld [vmem:[#allocation7 + $0x60] sm:$0xff]
        %v384 = vld [vmem:[#allocation7 + $0x68] sm:$0xff]
        %v385 = vld [vmem:[#allocation7 + $0x70] sm:$0xff]
        %v386 = vld [vmem:[#allocation7 + $0x78] sm:$0xff]
        %v387 = vld [vmem:[%s3] sm:$0x1]
        %v389 = vlaneseq
        %v390 = vshrl.u32 %v389, 7
        %v391 = vsub.s32 0, %v390
        %v392 = vrot.slane %v387, %v391
        %394 = vmatprep.subr.mxu0 0.0
        %395 = vmatpush1.msra.mxu0 %v371
        %396 = vmatprep.subr.mxu0 0.0
        %397 = vmatpush1.msra.mxu0 %v372
        %398 = vmatprep.subr.mxu0 0.0
        %399 = vmatpush1.msra.mxu0 %v373
        %400 = vmatprep.subr.mxu0 0.0
        %401 = vmatpush1.msra.mxu0 %v374
        %402 = vmatprep.subr.mxu0 0.0
        %403 = vmatpush1.msra.mxu0 %v375
        %404 = vmatprep.subr.mxu0 0.0
        %405 = vmatpush1.msra.mxu0 %v376
        %406 = vmatprep.subr.mxu0 0.0
        %407 = vmatpush1.msra.mxu0 %v377
        %408 = vmatprep.subr.mxu0 0.0
        %409 = vmatpush1.msra.mxu0 %v378
        %410 = vmatprep.subr.mxu0 0.0
        %411 = vmatpush1.msra.mxu0 %v379
        %412 = vmatprep.subr.mxu0 0.0
        %413 = vmatpush1.msra.mxu0 %v380
        %414 = vmatprep.subr.mxu0 0.0
        %415 = vmatpush1.msra.mxu0 %v381
        %416 = vmatprep.subr.mxu0 0.0
        %417 = vmatpush1.msra.mxu0 %v382
        %418 = vmatprep.subr.mxu0 0.0
        %419 = vmatpush1.msra.mxu0 %v383
        %420 = vmatprep.subr.mxu0 0.0
        %421 = vmatpush1.msra.mxu0 %v384
        %422 = vmatprep.subr.mxu0 0.0
        %423 = vmatpush1.msra.mxu0 %v385
        %424 = vmatprep.subr.mxu0 0.0
        %425 = vmatpush1.msra.mxu0 %v386
        %426 = vmatprep.subr.mxu0 0.0
        %427 = vmatpush1.msra.mxu0 0.0
        %428 = vmatprep.subr.mxu0 0.0
        %429 = vmatpush1.msra.mxu0 0.0
        %430 = vmatprep.subr.mxu0 0.0
        %431 = vmatpush1.msra.mxu0 0.0
        %432 = vmatprep.subr.mxu0 0.0
        %433 = vmatpush1.msra.mxu0 0.0
        %434 = vmatprep.subr.mxu0 0.0
        %435 = vmatpush1.msra.mxu0 0.0
        %436 = vmatprep.subr.mxu0 0.0
        %437 = vmatpush1.msra.mxu0 0.0
        %438 = vmatprep.subr.mxu0 0.0
        %439 = vmatpush1.msra.mxu0 0.0
        %440 = vmatprep.subr.mxu0 0.0
        %441 = vmatpush1.msra.mxu0 0.0
        %442 = vmatprep.subr.mxu0 0.0
        %443 = vmatpush1.msra.mxu0 0.0
        %444 = vmatprep.subr.mxu0 0.0
        %445 = vmatpush1.msra.mxu0 0.0
        %446 = vmatprep.subr.mxu0 0.0
        %447 = vmatpush1.msra.mxu0 0.0
        %448 = vmatprep.subr.mxu0 0.0
        %449 = vmatpush1.msra.mxu0 0.0
        %450 = vmatprep.subr.mxu0 0.0
        %451 = vmatpush1.msra.mxu0 0.0
        %452 = vmatprep.subr.mxu0 0.0
        %453 = vmatpush1.msra.mxu0 0.0
        %454 = vmatprep.subr.mxu0 0.0
        %455 = vmatpush1.msra.mxu0 0.0
        %456 = vmatprep.subr.mxu0 0.0
        %457 = vmatpush1.msra.mxu0 0.0
        %458 = vmatprep.mubr.f32.mxu0 0.0
        %459 = vmatmul.mubr.f32.gmra.mrb[0].mxu0 %v355
        %v460 = vpop.f32.mrb[0].mxu0
        %v461 = vadd.f32 %v392, %v460
        %v462 = vpop.f32.mrb[0].mxu0
        %463 = vmatprep.mubr.f32.mxu0 0.0
        %464 = vmatmul.mubr.f32.gmra.mrb[0].mxu0 %v356
        %v465 = vpop.f32.mrb[0].mxu0
        %v466 = vadd.f32 %v392, %v465
        %v467 = vpop.f32.mrb[0].mxu0
        %468 = vmatprep.mubr.f32.mxu0 0.0
        %469 = vmatmul.mubr.f32.gmra.mrb[0].mxu0 %v357
        %v470 = vpop.f32.mrb[0].mxu0
        %v471 = vadd.f32 %v392, %v470
        %v472 = vpop.f32.mrb[0].mxu0
        %473 = vmatprep.mubr.f32.mxu0 0.0
        %474 = vmatmul.mubr.f32.gmra.mrb[0].mxu0 %v358
        %v475 = vpop.f32.mrb[0].mxu0
        %v476 = vadd.f32 %v392, %v475
        %v477 = vpop.f32.mrb[0].mxu0
        %478 = vmatprep.mubr.f32.mxu0 0.0
        %479 = vmatmul.mubr.f32.gmra.mrb[0].mxu0 %v359
        %v480 = vpop.f32.mrb[0].mxu0
        %v481 = vadd.f32 %v392, %v480
        %v482 = vpop.f32.mrb[0].mxu0
        %483 = vmatprep.mubr.f32.mxu0 0.0
        %484 = vmatmul.mubr.f32.gmra.mrb[0].mxu0 %v360
        %v485 = vpop.f32.mrb[0].mxu0
        %v486 = vadd.f32 %v392, %v485
        %v487 = vpop.f32.mrb[0].mxu0
        %488 = vmatprep.mubr.f32.mxu0 0.0
        %489 = vmatmul.mubr.f32.gmra.mrb[0].mxu0 %v361
        %v490 = vpop.f32.mrb[0].mxu0
        %v491 = vadd.f32 %v392, %v490
        %v492 = vpop.f32.mrb[0].mxu0
        %493 = vmatprep.mubr.f32.mxu0 0.0
        %494 = vmatmul.mubr.f32.gmra.mrb[0].mxu0 %v362
        %v495 = vpop.f32.mrb[0].mxu0
        %v496 = vadd.f32 %v392, %v495
        %v497 = vpop.f32.mrb[0].mxu0
        %498 = vmatprep.mubr.f32.mxu0 0.0
        %499 = vmatmul.mubr.f32.gmra.mrb[0].mxu0 %v363
        %v500 = vpop.f32.mrb[0].mxu0
        %v501 = vadd.f32 %v392, %v500
        %v502 = vpop.f32.mrb[0].mxu0
        %503 = vmatprep.mubr.f32.mxu0 0.0
        %504 = vmatmul.mubr.f32.gmra.mrb[0].mxu0 %v364
        %v505 = vpop.f32.mrb[0].mxu0
        %v506 = vadd.f32 %v392, %v505
        %v507 = vpop.f32.mrb[0].mxu0
        %508 = vmatprep.mubr.f32.mxu0 0.0
        %509 = vmatmul.mubr.f32.gmra.mrb[0].mxu0 %v365
        %v510 = vpop.f32.mrb[0].mxu0
        %v511 = vadd.f32 %v392, %v510
        %v512 = vpop.f32.mrb[0].mxu0
        %513 = vmatprep.mubr.f32.mxu0 0.0
        %514 = vmatmul.mubr.f32.gmra.mrb[0].mxu0 %v366
        %v515 = vpop.f32.mrb[0].mxu0
        %v516 = vadd.f32 %v392, %v515
        %v517 = vpop.f32.mrb[0].mxu0
        %518 = vmatprep.mubr.f32.mxu0 0.0
        %519 = vmatmul.mubr.f32.gmra.mrb[0].mxu0 %v367
        %v520 = vpop.f32.mrb[0].mxu0
        %v521 = vadd.f32 %v392, %v520
        %v522 = vpop.f32.mrb[0].mxu0
        %523 = vmatprep.mubr.f32.mxu0 0.0
        %524 = vmatmul.mubr.f32.gmra.mrb[0].mxu0 %v368
        %v525 = vpop.f32.mrb[0].mxu0
        %v526 = vadd.f32 %v392, %v525
        %v527 = vpop.f32.mrb[0].mxu0
        %528 = vmatprep.mubr.f32.mxu0 0.0
        %529 = vmatmul.mubr.f32.gmra.mrb[0].mxu0 %v369
        %v530 = vpop.f32.mrb[0].mxu0
        %v531 = vadd.f32 %v392, %v530
        %v532 = vpop.f32.mrb[0].mxu0
        %533 = vmatprep.mubr.f32.mxu0 0.0
        %534 = vmatmul.mubr.f32.gmra.mrb[0].mxu0 %v370
        %v535 = vpop.f32.mrb[0].mxu0
        %v536 = vadd.f32 %v392, %v535
        %v537 = vpop.f32.mrb[0].mxu0
        %538 = vdwg.mxu0
        %539 = vmatprep.subr.mxu0 0.0
        %540 = vmatpush1.msra.mxu0 %v461
        %541 = vmatprep.subr.mxu0 0.0
        %542 = vmatpush1.msra.mxu0 %v466
        %543 = vmatprep.subr.mxu0 0.0
        %544 = vmatpush1.msra.mxu0 %v471
        %545 = vmatprep.subr.mxu0 0.0
        %546 = vmatpush1.msra.mxu0 %v476
        %547 = vmatprep.subr.mxu0 0.0
        %548 = vmatpush1.msra.mxu0 %v481
        %549 = vmatprep.subr.mxu0 0.0
        %550 = vmatpush1.msra.mxu0 %v486
        %551 = vmatprep.subr.mxu0 0.0
        %552 = vmatpush1.msra.mxu0 %v491
        %553 = vmatprep.subr.mxu0 0.0
        %554 = vmatpush1.msra.mxu0 %v496
        %555 = vmatprep.subr.mxu0 0.0
        %556 = vmatpush1.msra.mxu0 %v501
        %557 = vmatprep.subr.mxu0 0.0
        %558 = vmatpush1.msra.mxu0 %v506
        %559 = vmatprep.subr.mxu0 0.0
        %560 = vmatpush1.msra.mxu0 %v511
        %561 = vmatprep.subr.mxu0 0.0
        %562 = vmatpush1.msra.mxu0 %v516
        %563 = vmatprep.subr.mxu0 0.0
        %564 = vmatpush1.msra.mxu0 %v521
        %565 = vmatprep.subr.mxu0 0.0
        %566 = vmatpush1.msra.mxu0 %v526
        %567 = vmatprep.subr.mxu0 0.0
        %568 = vmatpush1.msra.mxu0 %v531
        %569 = vmatprep.subr.mxu0 0.0
        %570 = vmatpush1.msra.mxu0 %v536
        %571 = vmatprep.subr.mxu0 0.0
        %572 = vmatpush1.msra.mxu0 0.0
        %573 = vmatprep.subr.mxu0 0.0
        %574 = vmatpush1.msra.mxu0 0.0
        %575 = vmatprep.subr.mxu0 0.0
        %576 = vmatpush1.msra.mxu0 0.0
        %577 = vmatprep.subr.mxu0 0.0
        %578 = vmatpush1.msra.mxu0 0.0
        %579 = vmatprep.subr.mxu0 0.0
        %580 = vmatpush1.msra.mxu0 0.0
        %581 = vmatprep.subr.mxu0 0.0
        %582 = vmatpush1.msra.mxu0 0.0
        %583 = vmatprep.subr.mxu0 0.0
        %584 = vmatpush1.msra.mxu0 0.0
        %585 = vmatprep.subr.mxu0 0.0
        %586 = vmatpush1.msra.mxu0 0.0
        %587 = vmatprep.subr.mxu0 0.0
        %588 = vmatpush1.msra.mxu0 0.0
        %589 = vmatprep.subr.mxu0 0.0
        %590 = vmatpush1.msra.mxu0 0.0
        %591 = vmatprep.subr.mxu0 0.0
        %592 = vmatpush1.msra.mxu0 0.0
        %593 = vmatprep.subr.mxu0 0.0
        %594 = vmatpush1.msra.mxu0 0.0
        %595 = vmatprep.subr.mxu0 0.0
        %596 = vmatpush1.msra.mxu0 0.0
        %597 = vmatprep.subr.mxu0 0.0
        %598 = vmatpush1.msra.mxu0 0.0
        %599 = vmatprep.subr.mxu0 0.0
        %600 = vmatpush1.msra.mxu0 0.0
        %601 = vmatprep.subr.mxu0 0.0
        %602 = vmatpush1.msra.mxu0 0.0
        %603 = vmatprep.mubr.f32.mxu0 0.0
        %604 = vmatmul.mubr.f32.gmra.mrb[0].mxu0 %v339
        %v605 = vpop.f32.mrb[0].mxu0
        %v606 = vadd.f32 0.0, %v605
        %v607 = vpop.f32.mrb[0].mxu0
        %608 = vmatprep.mubr.f32.mxu0 0.0
        %609 = vmatmul.mubr.f32.gmra.mrb[0].mxu0 %v340
        %v610 = vpop.f32.mrb[0].mxu0
        %v611 = vadd.f32 0.0, %v610
        %v612 = vpop.f32.mrb[0].mxu0
        %613 = vmatprep.mubr.f32.mxu0 0.0
        %614 = vmatmul.mubr.f32.gmra.mrb[0].mxu0 %v341
        %v615 = vpop.f32.mrb[0].mxu0
        %v616 = vadd.f32 0.0, %v615
        %v617 = vpop.f32.mrb[0].mxu0
        %618 = vmatprep.mubr.f32.mxu0 0.0
        %619 = vmatmul.mubr.f32.gmra.mrb[0].mxu0 %v342
        %v620 = vpop.f32.mrb[0].mxu0
        %v621 = vadd.f32 0.0, %v620
        %v622 = vpop.f32.mrb[0].mxu0
        %623 = vmatprep.mubr.f32.mxu0 0.0
        %624 = vmatmul.mubr.f32.gmra.mrb[0].mxu0 %v343
        %v625 = vpop.f32.mrb[0].mxu0
        %v626 = vadd.f32 0.0, %v625
        %v627 = vpop.f32.mrb[0].mxu0
        %628 = vmatprep.mubr.f32.mxu0 0.0
        %629 = vmatmul.mubr.f32.gmra.mrb[0].mxu0 %v344
        %v630 = vpop.f32.mrb[0].mxu0
        %v631 = vadd.f32 0.0, %v630
        %v632 = vpop.f32.mrb[0].mxu0
        %633 = vmatprep.mubr.f32.mxu0 0.0
        %634 = vmatmul.mubr.f32.gmra.mrb[0].mxu0 %v345
        %v635 = vpop.f32.mrb[0].mxu0
        %v636 = vadd.f32 0.0, %v635
        %v637 = vpop.f32.mrb[0].mxu0
        %638 = vmatprep.mubr.f32.mxu0 0.0
        %639 = vmatmul.mubr.f32.gmra.mrb[0].mxu0 %v346
        %v640 = vpop.f32.mrb[0].mxu0
        %v641 = vadd.f32 0.0, %v640
        %v642 = vpop.f32.mrb[0].mxu0
        %643 = vmatprep.mubr.f32.mxu0 0.0
        %644 = vmatmul.mubr.f32.gmra.mrb[0].mxu0 %v347
        %v645 = vpop.f32.mrb[0].mxu0
        %v646 = vadd.f32 0.0, %v645
        %v647 = vpop.f32.mrb[0].mxu0
        %648 = vmatprep.mubr.f32.mxu0 0.0
        %649 = vmatmul.mubr.f32.gmra.mrb[0].mxu0 %v348
        %v650 = vpop.f32.mrb[0].mxu0
        %v651 = vadd.f32 0.0, %v650
        %v652 = vpop.f32.mrb[0].mxu0
        %653 = vmatprep.mubr.f32.mxu0 0.0
        %654 = vmatmul.mubr.f32.gmra.mrb[0].mxu0 %v349
        %v655 = vpop.f32.mrb[0].mxu0
        %v656 = vadd.f32 0.0, %v655
        %v657 = vpop.f32.mrb[0].mxu0
        %658 = vmatprep.mubr.f32.mxu0 0.0
        %659 = vmatmul.mubr.f32.gmra.mrb[0].mxu0 %v350
        %v660 = vpop.f32.mrb[0].mxu0
        %v661 = vadd.f32 0.0, %v660
        %v662 = vpop.f32.mrb[0].mxu0
        %663 = vmatprep.mubr.f32.mxu0 0.0
        %664 = vmatmul.mubr.f32.gmra.mrb[0].mxu0 %v351
        %v665 = vpop.f32.mrb[0].mxu0
        %v666 = vadd.f32 0.0, %v665
        %v667 = vpop.f32.mrb[0].mxu0
        %668 = vmatprep.mubr.f32.mxu0 0.0
        %669 = vmatmul.mubr.f32.gmra.mrb[0].mxu0 %v352
        %v670 = vpop.f32.mrb[0].mxu0
        %v671 = vadd.f32 0.0, %v670
        %v672 = vpop.f32.mrb[0].mxu0
        %673 = vmatprep.mubr.f32.mxu0 0.0
        %674 = vmatmul.mubr.f32.gmra.mrb[0].mxu0 %v353
        %v675 = vpop.f32.mrb[0].mxu0
        %v676 = vadd.f32 0.0, %v675
        %v677 = vpop.f32.mrb[0].mxu0
        %678 = vmatprep.mubr.f32.mxu0 0.0
        %679 = vmatmul.mubr.f32.gmra.mrb[0].mxu0 %v354
        %v680 = vpop.f32.mrb[0].mxu0
        %v681 = vadd.f32 0.0, %v680
        %v682 = vpop.f32.mrb[0].mxu0
        %683 = vdwg.mxu0
        %v684 = vmax.f32 %v606, 0.0
        %v685 = vmax.f32 %v611, 0.0
        %v686 = vmax.f32 %v616, 0.0
        %v687 = vmax.f32 %v621, 0.0
        %v688 = vmax.f32 %v626, 0.0
        %v689 = vmax.f32 %v631, 0.0
        %v690 = vmax.f32 %v636, 0.0
        %v691 = vmax.f32 %v641, 0.0
        %v692 = vmax.f32 %v646, 0.0
        %v693 = vmax.f32 %v651, 0.0
        %v694 = vmax.f32 %v656, 0.0
        %v695 = vmax.f32 %v661, 0.0
        %v696 = vmax.f32 %v666, 0.0
        %v697 = vmax.f32 %v671, 0.0
        %v698 = vmax.f32 %v676, 0.0
        %v699 = vmax.f32 %v681, 0.0
        %v700 = vld [vmem:[#allocation8] sm:$0xff]
        %v701 = vld [vmem:[#allocation8 + $0x8] sm:$0xff]
        %v702 = vld [vmem:[#allocation8 + $0x10] sm:$0xff]
        %v703 = vld [vmem:[#allocation8 + $0x18] sm:$0xff]
        %v704 = vld [vmem:[#allocation8 + $0x20] sm:$0xff]
        %v705 = vld [vmem:[#allocation8 + $0x28] sm:$0xff]
        %v706 = vld [vmem:[#allocation8 + $0x30] sm:$0xff]
        %v707 = vld [vmem:[#allocation8 + $0x38] sm:$0xff]
        %v708 = vld [vmem:[#allocation8 + $0x40] sm:$0xff]
        %v709 = vld [vmem:[#allocation8 + $0x48] sm:$0xff]
        %v710 = vld [vmem:[#allocation8 + $0x50] sm:$0xff]
        %v711 = vld [vmem:[#allocation8 + $0x58] sm:$0xff]
        %v712 = vld [vmem:[#allocation8 + $0x60] sm:$0xff]
        %v713 = vld [vmem:[#allocation8 + $0x68] sm:$0xff]
        %v714 = vld [vmem:[#allocation8 + $0x70] sm:$0xff]
        %v715 = vld [vmem:[#allocation8 + $0x78] sm:$0xff]
        %v716 = vld [vmem:[%s5] sm:$0x1]
        %v718 = vlaneseq
        %v719 = vshrl.u32 %v718, 7
        %v720 = vsub.s32 0, %v719
        %v721 = vrot.slane %v716, %v720
        %723 = vmatprep.subr.mxu0 0.0
        %724 = vmatpush1.msra.mxu0 %v700
        %725 = vmatprep.subr.mxu0 0.0
        %726 = vmatpush1.msra.mxu0 %v701
        %727 = vmatprep.subr.mxu0 0.0
        %728 = vmatpush1.msra.mxu0 %v702
        %729 = vmatprep.subr.mxu0 0.0
        %730 = vmatpush1.msra.mxu0 %v703
        %731 = vmatprep.subr.mxu0 0.0
        %732 = vmatpush1.msra.mxu0 %v704
        %733 = vmatprep.subr.mxu0 0.0
        %734 = vmatpush1.msra.mxu0 %v705
        %735 = vmatprep.subr.mxu0 0.0
        %736 = vmatpush1.msra.mxu0 %v706
        %737 = vmatprep.subr.mxu0 0.0
        %738 = vmatpush1.msra.mxu0 %v707
        %739 = vmatprep.subr.mxu0 0.0
        %740 = vmatpush1.msra.mxu0 %v708
        %741 = vmatprep.subr.mxu0 0.0
        %742 = vmatpush1.msra.mxu0 %v709
        %743 = vmatprep.subr.mxu0 0.0
        %744 = vmatpush1.msra.mxu0 %v710
        %745 = vmatprep.subr.mxu0 0.0
        %746 = vmatpush1.msra.mxu0 %v711
        %747 = vmatprep.subr.mxu0 0.0
        %748 = vmatpush1.msra.mxu0 %v712
        %749 = vmatprep.subr.mxu0 0.0
        %750 = vmatpush1.msra.mxu0 %v713
        %751 = vmatprep.subr.mxu0 0.0
        %752 = vmatpush1.msra.mxu0 %v714
        %753 = vmatprep.subr.mxu0 0.0
        %754 = vmatpush1.msra.mxu0 %v715
        %755 = vmatprep.subr.mxu0 0.0
        %756 = vmatpush1.msra.mxu0 0.0
        %757 = vmatprep.subr.mxu0 0.0
        %758 = vmatpush1.msra.mxu0 0.0
        %759 = vmatprep.subr.mxu0 0.0
        %760 = vmatpush1.msra.mxu0 0.0
        %761 = vmatprep.subr.mxu0 0.0
        %762 = vmatpush1.msra.mxu0 0.0
        %763 = vmatprep.subr.mxu0 0.0
        %764 = vmatpush1.msra.mxu0 0.0
        %765 = vmatprep.subr.mxu0 0.0
        %766 = vmatpush1.msra.mxu0 0.0
        %767 = vmatprep.subr.mxu0 0.0
        %768 = vmatpush1.msra.mxu0 0.0
        %769 = vmatprep.subr.mxu0 0.0
        %770 = vmatpush1.msra.mxu0 0.0
        %771 = vmatprep.subr.mxu0 0.0
        %772 = vmatpush1.msra.mxu0 0.0
        %773 = vmatprep.subr.mxu0 0.0
        %774 = vmatpush1.msra.mxu0 0.0
        %775 = vmatprep.subr.mxu0 0.0
        %776 = vmatpush1.msra.mxu0 0.0
        %777 = vmatprep.subr.mxu0 0.0
        %778 = vmatpush1.msra.mxu0 0.0
        %779 = vmatprep.subr.mxu0 0.0
        %780 = vmatpush1.msra.mxu0 0.0
        %781 = vmatprep.subr.mxu0 0.0
        %782 = vmatpush1.msra.mxu0 0.0
        %783 = vmatprep.subr.mxu0 0.0
        %784 = vmatpush1.msra.mxu0 0.0
        %785 = vmatprep.subr.mxu0 0.0
        %786 = vmatpush1.msra.mxu0 0.0
        %787 = vmatprep.mubr.f32.mxu0 0.0
        %788 = vmatmul.mubr.f32.gmra.mrb[0].mxu0 %v684
        %v789 = vpop.f32.mrb[0].mxu0
        %v790 = vadd.f32 %v721, %v789
        %v791 = vpop.f32.mrb[0].mxu0
        %792 = vmatprep.mubr.f32.mxu0 0.0
        %793 = vmatmul.mubr.f32.gmra.mrb[0].mxu0 %v685
        %v794 = vpop.f32.mrb[0].mxu0
        %v795 = vadd.f32 %v721, %v794
        %v796 = vpop.f32.mrb[0].mxu0
        %797 = vmatprep.mubr.f32.mxu0 0.0
        %798 = vmatmul.mubr.f32.gmra.mrb[0].mxu0 %v686
        %v799 = vpop.f32.mrb[0].mxu0
        %v800 = vadd.f32 %v721, %v799
        %v801 = vpop.f32.mrb[0].mxu0
        %802 = vmatprep.mubr.f32.mxu0 0.0
        %803 = vmatmul.mubr.f32.gmra.mrb[0].mxu0 %v687
        %v804 = vpop.f32.mrb[0].mxu0
        %v805 = vadd.f32 %v721, %v804
        %v806 = vpop.f32.mrb[0].mxu0
        %807 = vmatprep.mubr.f32.mxu0 0.0
        %808 = vmatmul.mubr.f32.gmra.mrb[0].mxu0 %v688
        %v809 = vpop.f32.mrb[0].mxu0
        %v810 = vadd.f32 %v721, %v809
        %v811 = vpop.f32.mrb[0].mxu0
        %812 = vmatprep.mubr.f32.mxu0 0.0
        %813 = vmatmul.mubr.f32.gmra.mrb[0].mxu0 %v689
        %v814 = vpop.f32.mrb[0].mxu0
        %v815 = vadd.f32 %v721, %v814
        %v816 = vpop.f32.mrb[0].mxu0
        %817 = vmatprep.mubr.f32.mxu0 0.0
        %818 = vmatmul.mubr.f32.gmra.mrb[0].mxu0 %v690
        %v819 = vpop.f32.mrb[0].mxu0
        %v820 = vadd.f32 %v721, %v819
        %v821 = vpop.f32.mrb[0].mxu0
        %822 = vmatprep.mubr.f32.mxu0 0.0
        %823 = vmatmul.mubr.f32.gmra.mrb[0].mxu0 %v691
        %v824 = vpop.f32.mrb[0].mxu0
        %v825 = vadd.f32 %v721, %v824
        %v826 = vpop.f32.mrb[0].mxu0
        %827 = vmatprep.mubr.f32.mxu0 0.0
        %828 = vmatmul.mubr.f32.gmra.mrb[0].mxu0 %v692
        %v829 = vpop.f32.mrb[0].mxu0
        %v830 = vadd.f32 %v721, %v829
        %v831 = vpop.f32.mrb[0].mxu0
        %832 = vmatprep.mubr.f32.mxu0 0.0
        %833 = vmatmul.mubr.f32.gmra.mrb[0].mxu0 %v693
        %v834 = vpop.f32.mrb[0].mxu0
        %v835 = vadd.f32 %v721, %v834
        %v836 = vpop.f32.mrb[0].mxu0
        %837 = vmatprep.mubr.f32.mxu0 0.0
        %838 = vmatmul.mubr.f32.gmra.mrb[0].mxu0 %v694
        %v839 = vpop.f32.mrb[0].mxu0
        %v840 = vadd.f32 %v721, %v839
        %v841 = vpop.f32.mrb[0].mxu0
        %842 = vmatprep.mubr.f32.mxu0 0.0
        %843 = vmatmul.mubr.f32.gmra.mrb[0].mxu0 %v695
        %v844 = vpop.f32.mrb[0].mxu0
        %v845 = vadd.f32 %v721, %v844
        %v846 = vpop.f32.mrb[0].mxu0
        %847 = vmatprep.mubr.f32.mxu0 0.0
        %848 = vmatmul.mubr.f32.gmra.mrb[0].mxu0 %v696
        %v849 = vpop.f32.mrb[0].mxu0
        %v850 = vadd.f32 %v721, %v849
        %v851 = vpop.f32.mrb[0].mxu0
        %852 = vmatprep.mubr.f32.mxu0 0.0
        %853 = vmatmul.mubr.f32.gmra.mrb[0].mxu0 %v697
        %v854 = vpop.f32.mrb[0].mxu0
        %v855 = vadd.f32 %v721, %v854
        %v856 = vpop.f32.mrb[0].mxu0
        %857 = vmatprep.mubr.f32.mxu0 0.0
        %858 = vmatmul.mubr.f32.gmra.mrb[0].mxu0 %v698
        %v859 = vpop.f32.mrb[0].mxu0
        %v860 = vadd.f32 %v721, %v859
        %v861 = vpop.f32.mrb[0].mxu0
        %862 = vmatprep.mubr.f32.mxu0 0.0
        %863 = vmatmul.mubr.f32.gmra.mrb[0].mxu0 %v699
        %v864 = vpop.f32.mrb[0].mxu0
        %v865 = vadd.f32 %v721, %v864
        %v866 = vpop.f32.mrb[0].mxu0
        %867 = vdwg.mxu0
        %868 = vmatprep.subr.mxu0 0.0
        %869 = vmatpush1.msra.mxu0 %v790
        %870 = vmatprep.subr.mxu0 0.0
        %871 = vmatpush1.msra.mxu0 %v795
        %872 = vmatprep.subr.mxu0 0.0
        %873 = vmatpush1.msra.mxu0 %v800
        %874 = vmatprep.subr.mxu0 0.0
        %875 = vmatpush1.msra.mxu0 %v805
        %876 = vmatprep.subr.mxu0 0.0
        %877 = vmatpush1.msra.mxu0 %v810
        %878 = vmatprep.subr.mxu0 0.0
        %879 = vmatpush1.msra.mxu0 %v815
        %880 = vmatprep.subr.mxu0 0.0
        %881 = vmatpush1.msra.mxu0 %v820
        %882 = vmatprep.subr.mxu0 0.0
        %883 = vmatpush1.msra.mxu0 %v825
        %884 = vmatprep.subr.mxu0 0.0
        %885 = vmatpush1.msra.mxu0 %v830
        %886 = vmatprep.subr.mxu0 0.0
        %887 = vmatpush1.msra.mxu0 %v835
        %888 = vmatprep.subr.mxu0 0.0
        %889 = vmatpush1.msra.mxu0 %v840
        %890 = vmatprep.subr.mxu0 0.0
        %891 = vmatpush1.msra.mxu0 %v845
        %892 = vmatprep.subr.mxu0 0.0
        %893 = vmatpush1.msra.mxu0 %v850
        %894 = vmatprep.subr.mxu0 0.0
        %895 = vmatpush1.msra.mxu0 %v855
        %896 = vmatprep.subr.mxu0 0.0
        %897 = vmatpush1.msra.mxu0 %v860
        %898 = vmatprep.subr.mxu0 0.0
        %899 = vmatpush1.msra.mxu0 %v865
        %900 = vmatprep.subr.mxu0 0.0
        %901 = vmatpush1.msra.mxu0 0.0
        %902 = vmatprep.subr.mxu0 0.0
        %903 = vmatpush1.msra.mxu0 0.0
        %904 = vmatprep.subr.mxu0 0.0
        %905 = vmatpush1.msra.mxu0 0.0
        %906 = vmatprep.subr.mxu0 0.0
        %907 = vmatpush1.msra.mxu0 0.0
        %908 = vmatprep.subr.mxu0 0.0
        %909 = vmatpush1.msra.mxu0 0.0
        %910 = vmatprep.subr.mxu0 0.0
        %911 = vmatpush1.msra.mxu0 0.0
        %912 = vmatprep.subr.mxu0 0.0
        %913 = vmatpush1.msra.mxu0 0.0
        %914 = vmatprep.subr.mxu0 0.0
        %915 = vmatpush1.msra.mxu0 0.0
        %916 = vmatprep.subr.mxu0 0.0
        %917 = vmatpush1.msra.mxu0 0.0
        %918 = vmatprep.subr.mxu0 0.0
        %919 = vmatpush1.msra.mxu0 0.0
        %920 = vmatprep.subr.mxu0 0.0
        %921 = vmatpush1.msra.mxu0 0.0
        %922 = vmatprep.subr.mxu0 0.0
        %923 = vmatpush1.msra.mxu0 0.0
        %924 = vmatprep.subr.mxu0 0.0
        %925 = vmatpush1.msra.mxu0 0.0
        %926 = vmatprep.subr.mxu0 0.0
        %927 = vmatpush1.msra.mxu0 0.0
        %928 = vmatprep.subr.mxu0 0.0
        %929 = vmatpush1.msra.mxu0 0.0
        %930 = vmatprep.subr.mxu0 0.0
        %931 = vmatpush1.msra.mxu0 0.0
        %932 = vmatprep.mubr.f32.mxu0 0.0
        %933 = vmatmul.mubr.f32.gmra.mrb[0].mxu0 %v339
        %v934 = vpop.f32.mrb[0].mxu0
        %v935 = vadd.f32 0.0, %v934
        %v936 = vpop.f32.mrb[0].mxu0
        %937 = vmatprep.mubr.f32.mxu0 0.0
        %938 = vmatmul.mubr.f32.gmra.mrb[0].mxu0 %v340
        %v939 = vpop.f32.mrb[0].mxu0
        %v940 = vadd.f32 0.0, %v939
        %v941 = vpop.f32.mrb[0].mxu0
        %942 = vmatprep.mubr.f32.mxu0 0.0
        %943 = vmatmul.mubr.f32.gmra.mrb[0].mxu0 %v341
        %v944 = vpop.f32.mrb[0].mxu0
        %v945 = vadd.f32 0.0, %v944
        %v946 = vpop.f32.mrb[0].mxu0
        %947 = vmatprep.mubr.f32.mxu0 0.0
        %948 = vmatmul.mubr.f32.gmra.mrb[0].mxu0 %v342
        %v949 = vpop.f32.mrb[0].mxu0
        %v950 = vadd.f32 0.0, %v949
        %v951 = vpop.f32.mrb[0].mxu0
        %952 = vmatprep.mubr.f32.mxu0 0.0
        %953 = vmatmul.mubr.f32.gmra.mrb[0].mxu0 %v343
        %v954 = vpop.f32.mrb[0].mxu0
        %v955 = vadd.f32 0.0, %v954
        %v956 = vpop.f32.mrb[0].mxu0
        %957 = vmatprep.mubr.f32.mxu0 0.0
        %958 = vmatmul.mubr.f32.gmra.mrb[0].mxu0 %v344
        %v959 = vpop.f32.mrb[0].mxu0
        %v960 = vadd.f32 0.0, %v959
        %v961 = vpop.f32.mrb[0].mxu0
        %962 = vmatprep.mubr.f32.mxu0 0.0
        %963 = vmatmul.mubr.f32.gmra.mrb[0].mxu0 %v345
        %v964 = vpop.f32.mrb[0].mxu0
        %v965 = vadd.f32 0.0, %v964
        %v966 = vpop.f32.mrb[0].mxu0
        %967 = vmatprep.mubr.f32.mxu0 0.0
        %968 = vmatmul.mubr.f32.gmra.mrb[0].mxu0 %v346
        %v969 = vpop.f32.mrb[0].mxu0
        %v970 = vadd.f32 0.0, %v969
        %v971 = vpop.f32.mrb[0].mxu0
        %972 = vmatprep.mubr.f32.mxu0 0.0
        %973 = vmatmul.mubr.f32.gmra.mrb[0].mxu0 %v347
        %v974 = vpop.f32.mrb[0].mxu0
        %v975 = vadd.f32 0.0, %v974
        %v976 = vpop.f32.mrb[0].mxu0
        %977 = vmatprep.mubr.f32.mxu0 0.0
        %978 = vmatmul.mubr.f32.gmra.mrb[0].mxu0 %v348
        %v979 = vpop.f32.mrb[0].mxu0
        %v980 = vadd.f32 0.0, %v979
        %v981 = vpop.f32.mrb[0].mxu0
        %982 = vmatprep.mubr.f32.mxu0 0.0
        %983 = vmatmul.mubr.f32.gmra.mrb[0].mxu0 %v349
        %v984 = vpop.f32.mrb[0].mxu0
        %v985 = vadd.f32 0.0, %v984
        %v986 = vpop.f32.mrb[0].mxu0
        %987 = vmatprep.mubr.f32.mxu0 0.0
        %988 = vmatmul.mubr.f32.gmra.mrb[0].mxu0 %v350
        %v989 = vpop.f32.mrb[0].mxu0
        %v990 = vadd.f32 0.0, %v989
        %v991 = vpop.f32.mrb[0].mxu0
        %992 = vmatprep.mubr.f32.mxu0 0.0
        %993 = vmatmul.mubr.f32.gmra.mrb[0].mxu0 %v351
        %v994 = vpop.f32.mrb[0].mxu0
        %v995 = vadd.f32 0.0, %v994
        %v996 = vpop.f32.mrb[0].mxu0
        %997 = vmatprep.mubr.f32.mxu0 0.0
        %998 = vmatmul.mubr.f32.gmra.mrb[0].mxu0 %v352
        %v999 = vpop.f32.mrb[0].mxu0
        %v1000 = vadd.f32 0.0, %v999
        %v1001 = vpop.f32.mrb[0].mxu0
        %1002 = vmatprep.mubr.f32.mxu0 0.0
        %1003 = vmatmul.mubr.f32.gmra.mrb[0].mxu0 %v353
        %v1004 = vpop.f32.mrb[0].mxu0
        %v1005 = vadd.f32 0.0, %v1004
        %v1006 = vpop.f32.mrb[0].mxu0
        %1007 = vmatprep.mubr.f32.mxu0 0.0
        %1008 = vmatmul.mubr.f32.gmra.mrb[0].mxu0 %v354
        %v1009 = vpop.f32.mrb[0].mxu0
        %v1010 = vadd.f32 0.0, %v1009
        %v1011 = vpop.f32.mrb[0].mxu0
        %1012 = vdwg.mxu0
        %1013 = vst [vmem:[%s338] sm:$0xff] %v935
        %1014 = vst [vmem:[%s338 + $0x8] sm:$0xff] %v940
        %1015 = vst [vmem:[%s338 + $0x10] sm:$0xff] %v945
        %1016 = vst [vmem:[%s338 + $0x18] sm:$0xff] %v950
        %1017 = vst [vmem:[%s338 + $0x20] sm:$0xff] %v955
        %1018 = vst [vmem:[%s338 + $0x28] sm:$0xff] %v960
        %1019 = vst [vmem:[%s338 + $0x30] sm:$0xff] %v965
        %1020 = vst [vmem:[%s338 + $0x38] sm:$0xff] %v970
        %1021 = vst [vmem:[%s338 + $0x40] sm:$0xff] %v975
        %1022 = vst [vmem:[%s338 + $0x48] sm:$0xff] %v980
        %1023 = vst [vmem:[%s338 + $0x50] sm:$0xff] %v985
        %1024 = vst [vmem:[%s338 + $0x58] sm:$0xff] %v990
        %1025 = vst [vmem:[%s338 + $0x60] sm:$0xff] %v995
        %1026 = vst [vmem:[%s338 + $0x68] sm:$0xff] %v1000
        %1027 = vst [vmem:[%s338 + $0x70] sm:$0xff] %v1005
        %1028 = vst [vmem:[%s338 + $0x78] sm:$0xff] %v1010
        %s1029 = sand.u32 %s171, 1
        %s1030 = scalar_lea.sflag [#allocation4], %s1029
        %s1031 = sand.u32 %s171, 1
        %s1032 = smul.addr %s1031, 128
        %s1033 = scalar_lea.vmem [#allocation10], %s1032
        // Predicated region
        $region61: #{tpu_custom_call.1} parent=43 // pred_check
          %p1034 = pneg %p181
        $region62: #{tpu_custom_call.1} parent=43 // pred_check_branch
          %1036 = sbr.rel (%p1034) target = $region64
        $region63: #{tpu_custom_call.1} parent=43 // pred_region
          %s1038 = ssub.s32 2048, 2048
          %1039 = vsyncadd %s1030, %s1038
          %s1040 = smul.addr %s27, 16
          %s1041 = smul.addr %s1040, 128
          %s1042 = scalar_lea.hbm %s6, %s1041
          %s1043 = sshll.u32 %s1033, 4
          %s1044 = int_to_ptr.vmem [resolvable:$true] %s1043
          %1049 = dma.vmem_to_hbm [thread:$0]  %s1044, 2048, %s1042, %s1030, 128, 128, 8
        $region64: #{tpu_custom_call.1} parent=43 // pred_fallthru
          _
      $region44: #{tpu_custom_call.1} parent=5 // pred_fallthru
        _
      %p1050 = scmp.le.s32.totalorder 2, %s22
      // Predicated region
      $region65: #{tpu_custom_call.1} parent=5 // pred_check
        %p1051 = pneg %p1050
      $region66: #{tpu_custom_call.1} parent=5 // pred_check_branch
        %1053 = sbr.rel (%p1051) target = $region68
      $region67: #{tpu_custom_call.1} parent=5 // pred_region
        %s1054 = ssub.s32 %s22, 2
        // Predicated region
        $region69: #{tpu_custom_call.1} parent=67 // pred_check
          %p1055 = pneg %p187
        $region70: #{tpu_custom_call.1} parent=67 // pred_check_branch
          %1057 = sbr.rel (%p1055) target = $region72
        $region71: #{tpu_custom_call.1} parent=67 // pred_region
          %s1058 = sand.u32 %s172, 1
          %s1059 = scalar_lea.sflag [#allocation4], %s1058
          %s1060 = sand.u32 %s172, 1
          %s1061 = smul.addr %s1060, 128
          %s1062 = scalar_lea.vmem [#allocation10], %s1061
          %1063 = dma.done %s1059, 2048
        $region72: #{tpu_custom_call.1} parent=67 // pred_fallthru
          _
      $region68: #{tpu_custom_call.1} parent=5 // pred_fallthru
        _
    $region6: #{tpu_custom_call.1} parent=1 // loop_footer
      %s26 = sadd.s32 1, %s22
    $region7: #{tpu_custom_call.1} parent=1 // loop_footer_branch
      %21 = sbr.rel target = $region3
    $region8: #{tpu_custom_call.1} parent=1 // loop_exit
      _
    %1064 = vsyncpa [#allocation3], 1
    %s1065 = scalar_lea.sflag [#allocation3], 1
    %1066 = vsyncpa %s1065, 1
    %1067 = vsyncpa [#allocation6], 1
    %s1068 = scalar_lea.sflag [#allocation6], 1
    %1069 = vsyncpa %s1068, 1
    %1070 = vsyncpa [#allocation9], 1
    %1071 = vsyncpa [#allocation4], 1
    %s1072 = scalar_lea.sflag [#allocation4], 1
    %1073 = vsyncpa %s1072, 1

</llo_original>
